<compile_context>
chip_gen: v5e
topology: v5e:2x2
jax: 0.10.0
libtpu: 0.0.40
codegen_flags: <defaults>
</compile_context>

<pallas_src>
import functools

import jax
import jax.numpy as jnp
from jax.experimental import pallas as pl
from jax.experimental.pallas import tpu as pltpu

_LANE = 128
# (4096, 128) f32 block = 2 MiB per buffer; ~8 MiB total double-buffered
# (input + output), safe on every generation's default scoped-VMEM budget.
_DEFAULT_BLOCK_ROWS = 4096
# Aim for at least this many grid steps on large inputs so the "parallel"
# grid axis gives both v7x TensorCores DMA work and the pipeline has depth.
_MIN_GRID_STEPS = 8


def _h_swish_kernel(x_ref, o_ref):
    # y = x * relu6(x + 3) / 6, computed in f32 on the VPU.
    x = x_ref[...].astype(jnp.float32)
    y = x * (jnp.clip(x + 3.0, 0.0, 6.0) * (1.0 / 6.0))
    o_ref[...] = y.astype(o_ref.dtype)


def _sublane_multiple(dtype):
    # 8 rows per sublane tile for 4-byte types, 16 for bf16/fp16, 32 for int8/fp8.
    itemsize = jnp.dtype(dtype).itemsize
    return max(8, 32 // max(1, itemsize))


@functools.partial(jax.jit, static_argnames=("block_rows",))
def h_swish(x, *, block_rows=_DEFAULT_BLOCK_ROWS):
    """Elementwise h_swish for any shape/dtype (matches the PyTorch module)."""
    orig_shape = x.shape
    orig_dtype = x.dtype
    n = x.size

    sub = _sublane_multiple(orig_dtype)

    # Lane-dense 2-D view. Pad only to the 128-lane boundary; the ragged last
    # grid block is masked by Pallas, so rows is NOT rounded to a tile multiple.
    rows = pl.cdiv(n, _LANE)
    total = rows * _LANE
    padded = total != n

    x_flat = jnp.ravel(x)
    if padded:
        # Zero padding is harmless: h_swish(0) == 0 and padded lanes are sliced off.
        x_flat = jnp.pad(x_flat, (0, total - n))
    x2d = x_flat.reshape(rows, _LANE)

    # Tile rows: as large as the VMEM budget allows, clamped so big inputs get
    # enough grid steps for multi-TensorCore chips, rounded to a sublane multiple.
    tm = min(block_rows, rows)
    if rows > sub * _MIN_GRID_STEPS:
        tm = min(tm, pl.cdiv(rows, _MIN_GRID_STEPS))
    tm = max(sub, ((tm + sub - 1) // sub) * sub)
    grid = pl.cdiv(rows, tm)

    cost = pl.CostEstimate(
        flops=5 * n,
        transcendentals=0,
        bytes_accessed=2 * n * jnp.dtype(orig_dtype).itemsize,
    )

    compiler_params = pltpu.CompilerParams(
        dimension_semantics=("parallel",),
        # When a lane pad was needed, let XLA fuse the pad/reshape producer
        # into the pallas_call input instead of materializing an HBM copy.
        allow_input_fusion=[True] if padded else None,
    )

    y2d = pl.pallas_call(
        _h_swish_kernel,
        out_shape=jax.ShapeDtypeStruct((rows, _LANE), orig_dtype),
        grid=(grid,),
        in_specs=[pl.BlockSpec((tm, _LANE), lambda i: (i, 0))],
        out_specs=pl.BlockSpec((tm, _LANE), lambda i: (i, 0)),
        compiler_params=compiler_params,
        cost_estimate=cost,
    )(x2d)

    if padded:
        return y2d.reshape(total)[:n].reshape(orig_shape)
    return y2d.reshape(orig_shape)


if __name__ == "__main__":
    key = jax.random.PRNGKey(0)
    # NCHW input like the PyTorch module would see; scaled so both relu6
    # saturation regions (x < -3 and x > 3) are exercised.
    x = jax.random.normal(key, (2, 4, 16, 16), jnp.float32) * 4.0

    y = h_swish(x)
    jax.block_until_ready(y)

    # Reference: x * relu6(x + 3) / 6
    ref = x * (jnp.clip(x + 3.0, 0.0, 6.0) / 6.0)
    assert y.shape == x.shape and y.dtype == x.dtype
    assert bool(jnp.allclose(y, ref, atol=1e-6, rtol=1e-6))
    print("KERNEL_OK")
</pallas_src>

<mosaic_0001>
module attributes {stable_mosaic.version = 11 : i64} {
  func.func @_h_swish_kernel(%arg0: i32, %arg1: memref<16x128xf32, #tpu.memory_space<vmem>>, %arg2: memref<16x128xf32, #tpu.memory_space<vmem>>) attributes {dimension_semantics = [#tpu.dimension_semantics<parallel>], iteration_bounds = array<i64: 1>, scalar_prefetch = 0 : i64, scratch_operands = 0 : i64, tpu.core_type = #tpu.core_type<tc>, window_params = [{transform_indices = @transform_0, window_bounds = array<i64: 16, 128>}, {transform_indices = @transform_1, window_bounds = array<i64: 16, 128>}]} {
    %c0 = arith.constant 0 : index
    %c0_0 = arith.constant 0 : index
    %0 = vector.load %arg1[%c0, %c0_0] : memref<16x128xf32, #tpu.memory_space<vmem>>, vector<16x128xf32>
    %cst = arith.constant 3.000000e+00 : f32
    %1 = vector.broadcast %cst : f32 to vector<16x128xf32>
    %2 = arith.addf %0, %1 : vector<16x128xf32>
    %cst_1 = arith.constant 0.000000e+00 : f32
    %cst_2 = arith.constant 6.000000e+00 : f32
    %3 = vector.broadcast %cst_1 : f32 to vector<16x128xf32>
    %4 = arith.maximumf %3, %2 : vector<16x128xf32>
    %5 = vector.broadcast %cst_2 : f32 to vector<16x128xf32>
    %6 = arith.minimumf %5, %4 : vector<16x128xf32>
    %cst_3 = arith.constant 0.166666672 : f32
    %7 = vector.broadcast %cst_3 : f32 to vector<16x128xf32>
    %8 = arith.mulf %6, %7 : vector<16x128xf32>
    %9 = arith.mulf %0, %8 : vector<16x128xf32>
    %c0_4 = arith.constant 0 : index
    %c0_5 = arith.constant 0 : index
    %10 = vector.load %arg2[%c0_4, %c0_5] : memref<16x128xf32, #tpu.memory_space<vmem>>, vector<16x128xf32>
    tpu.vector_store %arg2[%c0_4, %c0_5], %9 {strides = array<i32>} : memref<16x128xf32, #tpu.memory_space<vmem>>, vector<16x128xf32>,
    return
  }
  func.func @transform_0(%arg0: i32) -> (i32, i32) {
    %c0_i32 = arith.constant 0 : i32
    %c0_i32_0 = arith.constant 0 : i32
    return %arg0, %c0_i32 : i32, i32
  }
  func.func @transform_1(%arg0: i32) -> (i32, i32) {
    %c0_i32 = arith.constant 0 : i32
    %c0_i32_0 = arith.constant 0 : i32
    return %arg0, %c0_i32 : i32, i32
  }
}

</mosaic_0001>

<llo_original>
// kernel: h_swish.1
$region0: #{h_swish.1}
  #allocation0 [shape = 'u32[]', space=smem, size = 0x4, offset = 0x4, fixed_abs, tag = 'smem constant byte address 0x4 - core index']
  #allocation1 [shape = 'u32[72,128]{1,0:T(1,128)}', space=vmem, size = 0x9000, scoped, tag = 'internal scratch']
  %s0 = inlined_call_operand.vmem [shape: f32[16,128], index: 0, kind: input, shape index: {}]
  %s1 = inlined_call_operand.vmem [shape: f32[16,128], index: 1, kind: output, shape index: {}]
  %s2 = sld [smem:[#allocation0]]
  $region14: #{h_swish.1} parent=0
    _
  %s4 = ssub.s32 1, %s2
  %s5 = scalar_select 0, %s4, %s2
  // Predicated region
  $region2: #{h_swish.1} parent=0 // pred_check
    _
  $region3: #{h_swish.1} parent=0 // pred_check_branch
    %7 = sbr.rel (0) target = $region5
  $region4: #{h_swish.1} parent=0 // pred_region
    _
  $region5: #{h_swish.1} parent=0 // pred_fallthru
    _
  %v8 = vld [vmem:[%s0] sm:$0xff]
  %v9 = vld [vmem:[%s0 + $0x8] sm:$0xff]
  %v10 = vadd.f32 %v8, 3.0
  %v11 = vadd.f32 %v9, 3.0
  %v12 = vmax.f32 %v10, 0.0
  %v13 = vmax.f32 %v11, 0.0
  %v14 = vmin.f32 %v12, 6.0
  %v15 = vmin.f32 %v13, 6.0
  %v16 = vmul.f32 %v14, 0.16666667
  %v17 = vmul.f32 %v15, 0.16666667
  %v18 = vmul.f32 %v8, %v16
  %v19 = vmul.f32 %v9, %v17
  %20 = vst [vmem:[%s1] sm:$0xff] %v18
  %21 = vst [vmem:[%s1 + $0x8] sm:$0xff] %v19
  // Predicated region
  $region6: #{h_swish.1} parent=0 // pred_check
    _
  $region7: #{h_swish.1} parent=0 // pred_check_branch
    %23 = sbr.rel (0) target = $region9
  $region8: #{h_swish.1} parent=0 // pred_region
    _
  $region9: #{h_swish.1} parent=0 // pred_fallthru
    _
  // Predicated region
  $region10: #{h_swish.1} parent=0 // pred_check
    _
  $region11: #{h_swish.1} parent=0 // pred_check_branch
    %25 = sbr.rel (0) target = $region13
  $region12: #{h_swish.1} parent=0 // pred_region
    _
  $region13: #{h_swish.1} parent=0 // pred_fallthru
    _

</llo_original>
